<compile_context>
chip_gen: v7x
topology: tpu7x:2x2x1
jax: 0.10.0
libtpu: 0.0.40
codegen_flags: <defaults>
</compile_context>

<pallas_src>
import jax
import jax.numpy as jnp
from jax.experimental import pallas as pl
from jax.experimental.pallas import tpu as pltpu


def _round_up(x, m):
    return (x + m - 1) // m * m


# --------------------------- fused Pallas kernel -----------------------------

def _upsampling_mlp_kernel(x_ref, w1_ref, b1_ref, w2_ref, b2_ref, o_ref):
    """o = relu(x @ w1 + b1) @ w2 + b2, chained in VMEM/registers (f32 acc)."""
    x = x_ref[...]
    h = jnp.dot(x, w1_ref[...], preferred_element_type=jnp.float32)
    h = jnp.maximum(h + b1_ref[...], 0.0)             # bias (1, H) broadcasts
    y = jnp.dot(h.astype(w2_ref.dtype), w2_ref[...],
                preferred_element_type=jnp.float32)
    y = y + b2_ref[...]
    o_ref[...] = y.astype(o_ref.dtype)


def upsampling_forward(params, cluster_encoding_batch, *, tile_m_cap=2048,
                       io_dtype=None, vmem_limit_bytes=None):
    """Pallas equivalent of UpSampling.forward.

    io_dtype: optional dtype (e.g. jnp.bfloat16) for the HBM-resident operands
      and the output. Accumulation stays f32. None keeps the input dtype.
    """
    n, i, d = cluster_encoding_batch.shape
    branching = params["branching"]
    w1, b1, w2, b2 = params["w1"], params["b1"], params["w2"], params["b2"]
    hidden = w1.shape[1]
    c = w2.shape[1]
    assert w1.shape[0] == d and c == d * branching, \
        "mlp must map R^D -> R^(D*branching)"

    m = n * i
    x = cluster_encoding_batch.reshape(m, d)

    if io_dtype is not None:
        x = x.astype(io_dtype)
        w1 = w1.astype(io_dtype)
        b1 = b1.astype(io_dtype)
        w2 = w2.astype(io_dtype)
        b2 = b2.astype(io_dtype)
    out_dtype = x.dtype

    # Row tile: multiple of 8 sublanes, capped at 2048 rows, and also capped at
    # ceil(m/2) so the parallel grid has >= 2 steps (both v7x TCs engage).
    tile_m = max(8, min(tile_m_cap, _round_up(pl.cdiv(m, 2), 8)))
    grid_m = pl.cdiv(m, tile_m)           # ragged last block handled by Pallas

    if vmem_limit_bytes is None:
        io_bytes = jnp.dtype(out_dtype).itemsize
        w_bytes = jnp.dtype(w1.dtype).itemsize
        need = (2 * tile_m * d * jnp.dtype(x.dtype).itemsize   # x double buffer
                + 2 * tile_m * c * io_bytes                    # out double buffer
                + tile_m * hidden * 4                          # f32 intermediate
                + (d * hidden + hidden + hidden * c + c) * w_bytes)  # weights
        vmem_limit_bytes = min(128 * 1024 * 1024,
                               int(need * 1.5) + (1 << 20))    # headroom

    out = pl.pallas_call(
        _upsampling_mlp_kernel,
        out_shape=jax.ShapeDtypeStruct((m, c), out_dtype),
        grid_spec=pltpu.PrefetchScalarGridSpec(
            num_scalar_prefetch=0,
            grid=(grid_m,),
            in_specs=[
                pl.BlockSpec((tile_m, d), lambda b: (b, 0)),    # row tile (pipelined)
                pl.BlockSpec((d, hidden), lambda b: (0, 0)),    # w1 resident in VMEM
                pl.BlockSpec((1, hidden), lambda b: (0, 0)),    # b1 resident
                pl.BlockSpec((hidden, c), lambda b: (0, 0)),    # w2 resident
                pl.BlockSpec((1, c), lambda b: (0, 0)),         # b2 resident
            ],
            out_specs=pl.BlockSpec((tile_m, c), lambda b: (b, 0)),
        ),
        compiler_params=pltpu.CompilerParams(
            dimension_semantics=("parallel",),   # rows independent -> both v7x TCs
            vmem_limit_bytes=vmem_limit_bytes,
        ),
    )(x, w1, b1, w2, b2)

    # Row-major reinterpretation, identical to torch's `.view(N, -1, D)`.
    return out.reshape(n, i * branching, d)


# --------------------------- parameters (deterministic) ----------------------

def init_upsampling_params(key, d, hidden, branching):
    k1, k2, k3, k4 = jax.random.split(key, 4)
    c = d * branching
    return {
        "branching": branching,
        "w1": jax.random.normal(k1, (d, hidden), jnp.float32) / jnp.sqrt(d),
        "b1": 0.01 * jax.random.normal(k2, (1, hidden), jnp.float32),
        "w2": jax.random.normal(k3, (hidden, c), jnp.float32) / jnp.sqrt(hidden),
        "b2": 0.01 * jax.random.normal(k4, (1, c), jnp.float32),
    }


# --------------------------- demo --------------------------------------------

if __name__ == "__main__":
    N, I, D = 2, 16, 32          # batch, clusters, cluster-encoding dim
    BRANCHING, HIDDEN = 4, 64    # D * BRANCHING = 128 -> lane-dense output

    key = jax.random.PRNGKey(0)
    kp, kx = jax.random.split(key)
    params = init_upsampling_params(kp, D, HIDDEN, BRANCHING)
    cluster_encoding = jax.random.normal(kx, (N, I, D), jnp.float32)

    # Pure-JAX reference (same math, outside Pallas).
    xf = cluster_encoding.reshape(-1, D)
    ref = (jnp.maximum(xf @ params["w1"] + params["b1"], 0.0)
           @ params["w2"] + params["b2"]).reshape(N, I * BRANCHING, D)

    # f32 path (default dtype preserved).
    out = upsampling_forward(params, cluster_encoding)
    jax.block_until_ready(out)
    assert out.shape == (N, I * BRANCHING, D), out.shape
    assert jnp.allclose(out, ref, rtol=2e-2, atol=2e-2), \
        float(jnp.max(jnp.abs(out - ref)))

    # bf16 I/O path (halved HBM bytes; f32 accumulation), looser tolerance.
    out_bf16 = upsampling_forward(params, cluster_encoding, io_dtype=jnp.bfloat16)
    jax.block_until_ready(out_bf16)
    assert out_bf16.dtype == jnp.bfloat16
    assert out_bf16.shape == (N, I * BRANCHING, D), out_bf16.shape
    assert jnp.allclose(out_bf16.astype(jnp.float32), ref, rtol=1.5e-1, atol=1.5e-1), \
        float(jnp.max(jnp.abs(out_bf16.astype(jnp.float32) - ref)))

    print("KERNEL_OK")
</pallas_src>

<mosaic_0001>
module attributes {stable_mosaic.version = 11 : i64} {
  func.func @_upsampling_mlp_kernel(%arg0: i32, %arg1: memref<16x32xf32, #tpu.memory_space<vmem>>, %arg2: memref<32x64xf32, #tpu.memory_space<vmem>>, %arg3: memref<1x64xf32, #tpu.memory_space<vmem>>, %arg4: memref<64x128xf32, #tpu.memory_space<vmem>>, %arg5: memref<1x128xf32, #tpu.memory_space<vmem>>, %arg6: memref<16x128xf32, #tpu.memory_space<vmem>>) attributes {dimension_semantics = [#tpu.dimension_semantics<parallel>], iteration_bounds = array<i64: 2>, scalar_prefetch = 0 : i64, scratch_operands = 0 : i64, tpu.core_type = #tpu.core_type<tc>, window_params = [{transform_indices = @transform_0, window_bounds = array<i64: 16, 32>}, {pipeline_mode = #tpu.pipeline_mode<synchronous>, transform_indices = @transform_1, window_bounds = array<i64: 32, 64>}, {pipeline_mode = #tpu.pipeline_mode<synchronous>, transform_indices = @transform_2, window_bounds = array<i64: 1, 64>}, {pipeline_mode = #tpu.pipeline_mode<synchronous>, transform_indices = @transform_3, window_bounds = array<i64: 64, 128>}, {pipeline_mode = #tpu.pipeline_mode<synchronous>, transform_indices = @transform_4, window_bounds = array<i64: 1, 128>}, {transform_indices = @transform_5, window_bounds = array<i64: 16, 128>}]} {
    %c0 = arith.constant 0 : index
    %c0_0 = arith.constant 0 : index
    %0 = vector.load %arg1[%c0, %c0_0] : memref<16x32xf32, #tpu.memory_space<vmem>>, vector<16x32xf32>
    %c0_1 = arith.constant 0 : index
    %c0_2 = arith.constant 0 : index
    %1 = vector.load %arg2[%c0_1, %c0_2] : memref<32x64xf32, #tpu.memory_space<vmem>>, vector<32x64xf32>
    %cst = arith.constant dense<0.000000e+00> : vector<16x64xf32>
    %2 = tpu.matmul %0, %1, %cst {dimension_numbers = #tpu.dot_dimension_numbers<[1], [0], [0], [1], [0, 0, 1, 1], [], []>} : vector<16x32xf32>, vector<32x64xf32>, vector<16x64xf32> -> vector<16x64xf32>
    %c0_3 = arith.constant 0 : index
    %c0_4 = arith.constant 0 : index
    %3 = vector.load %arg3[%c0_3, %c0_4] : memref<1x64xf32, #tpu.memory_space<vmem>>, vector<1x64xf32>
    %4 = vector.broadcast %3 : vector<1x64xf32> to vector<16x64xf32>
    %5 = arith.addf %2, %4 : vector<16x64xf32>
    %cst_5 = arith.constant 0.000000e+00 : f32
    %6 = vector.broadcast %cst_5 : f32 to vector<16x64xf32>
    %7 = arith.maximumf %5, %6 : vector<16x64xf32>
    %c0_6 = arith.constant 0 : index
    %c0_7 = arith.constant 0 : index
    %8 = vector.load %arg4[%c0_6, %c0_7] : memref<64x128xf32, #tpu.memory_space<vmem>>, vector<64x128xf32>
    %cst_8 = arith.constant dense<0.000000e+00> : vector<16x128xf32>
    %9 = tpu.matmul %7, %8, %cst_8 {dimension_numbers = #tpu.dot_dimension_numbers<[1], [0], [0], [1], [0, 0, 1, 1], [], []>} : vector<16x64xf32>, vector<64x128xf32>, vector<16x128xf32> -> vector<16x128xf32>
    %c0_9 = arith.constant 0 : index
    %c0_10 = arith.constant 0 : index
    %10 = vector.load %arg5[%c0_9, %c0_10] : memref<1x128xf32, #tpu.memory_space<vmem>>, vector<1x128xf32>
    %11 = vector.broadcast %10 : vector<1x128xf32> to vector<16x128xf32>
    %12 = arith.addf %9, %11 : vector<16x128xf32>
    %c0_11 = arith.constant 0 : index
    %c0_12 = arith.constant 0 : index
    %13 = vector.load %arg6[%c0_11, %c0_12] : memref<16x128xf32, #tpu.memory_space<vmem>>, vector<16x128xf32>
    tpu.vector_store %arg6[%c0_11, %c0_12], %12 {strides = array<i32>} : memref<16x128xf32, #tpu.memory_space<vmem>>, vector<16x128xf32>,
    return
  }
  func.func @transform_0(%arg0: i32) -> (i32, i32) {
    %c0_i32 = arith.constant 0 : i32
    %c0_i32_0 = arith.constant 0 : i32
    return %arg0, %c0_i32 : i32, i32
  }
  func.func @transform_1(%arg0: i32) -> (i32, i32) {
    %c0_i32 = arith.constant 0 : i32
    %c0_i32_0 = arith.constant 0 : i32
    %c0_i32_1 = arith.constant 0 : i32
    return %c0_i32, %c0_i32_0 : i32, i32
  }
  func.func @transform_2(%arg0: i32) -> (i32, i32) {
    %c0_i32 = arith.constant 0 : i32
    %c0_i32_0 = arith.constant 0 : i32
    %c0_i32_1 = arith.constant 0 : i32
    return %c0_i32, %c0_i32_0 : i32, i32
  }
  func.func @transform_3(%arg0: i32) -> (i32, i32) {
    %c0_i32 = arith.constant 0 : i32
    %c0_i32_0 = arith.constant 0 : i32
    %c0_i32_1 = arith.constant 0 : i32
    return %c0_i32, %c0_i32_0 : i32, i32
  }
  func.func @transform_4(%arg0: i32) -> (i32, i32) {
    %c0_i32 = arith.constant 0 : i32
    %c0_i32_0 = arith.constant 0 : i32
    %c0_i32_1 = arith.constant 0 : i32
    return %c0_i32, %c0_i32_0 : i32, i32
  }
  func.func @transform_5(%arg0: i32) -> (i32, i32) {
    %c0_i32 = arith.constant 0 : i32
    %c0_i32_0 = arith.constant 0 : i32
    return %arg0, %c0_i32 : i32, i32
  }
}

</mosaic_0001>

<llo_original>
// kernel: tpu_custom_call.1
$region0: #{tpu_custom_call.1}
  #allocation0 [shape = 'u32[]', space=smem, size = 0x4, offset = 0x4, fixed_abs, tag = 'smem constant byte address 0x4 - core index']
  #allocation1 [shape = 'u32[144,128]{1,0:T(1,128)}', space=vmem, size = 0x12000, scoped, tag = 'internal scratch']
  %s0 = inlined_call_operand.hbm [shape: f32[32,32], index: 0, kind: input, shape index: {}]
  %s1 = inlined_call_operand.hbm [shape: f32[32,64], index: 1, kind: input, shape index: {}]
  %s2 = inlined_call_operand.vmem [shape: f32[1,64], index: 2, kind: input, shape index: {}]
  %s3 = inlined_call_operand.hbm [shape: f32[64,128], index: 3, kind: input, shape index: {}]
  %s4 = inlined_call_operand.vmem [shape: f32[1,128], index: 4, kind: input, shape index: {}]
  %s5 = inlined_call_operand.hbm [shape: f32[32,128], index: 5, kind: output, shape index: {}]
  %s6 = sld [smem:[#allocation0]]
  $region65: #{tpu_custom_call.1} parent=0
    _
  %s8 = ssub.s32 1, %s6
  %s9 = scalar_select 0, %s8, %s6
  $region1: #{tpu_custom_call.1} parent=0
    #allocation2 [shape = 'u8[16384]{0}', space=vmem, size = 0x4000, scoped, tag = 'input window, operand 0']
    #allocation3 [shape = 's32[2]{0}', space=sflag, size = 0x8, scoped, tag = 'scoped memory for tpu_custom_call.1']
    #allocation4 [shape = 's32[2]{0}', space=sflag, size = 0x8, scoped, tag = 'scoped memory for tpu_custom_call.1']
    #allocation5 [shape = 'u8[16384]{0}', space=vmem, size = 0x4000, scoped, tag = 'input window, operand 1, single buffered']
    #allocation6 [shape = 's32[1]{0}', space=sflag, size = 0x4, scoped, tag = 'scoped memory for tpu_custom_call.1']
    #allocation7 [shape = 'u8[32768]{0}', space=vmem, size = 0x8000, scoped, tag = 'input window, operand 3, single buffered']
    #allocation8 [shape = 'u8[16384]{0}', space=vmem, size = 0x4000, scoped, tag = 'output window, operand 0']
    %10 = vsyncpa [#allocation3], 0
    %s11 = scalar_lea.sflag [#allocation3], 1
    %12 = vsyncpa %s11, 0
    %13 = vsyncpa [#allocation6], 0
    %14 = vsyncpa [#allocation4], 0
    %s15 = scalar_lea.sflag [#allocation4], 1
    %16 = vsyncpa %s15, 0
    loop: start=0, step=1, limit=4
    $region2: #{tpu_custom_call.1} parent=1 // loop_pre_header
      _
    $region3: #{tpu_custom_call.1} parent=1 // loop_header
      %s18 = sphi 0, %s22
      %p19 = scmp.ge.s32.totalorder %s18, 4
      %s28 = sphi 0, %s30
      %s31 = sphi 0, %s28
      %s32 = sphi 0, %s31
      %s48 = sphi 0, %s32
      %s52 = sphi 0, %s52
      %s54 = sphi 0, %s52
      %s55 = sphi 0, %s54
      %s69 = sphi 0, %s55
      %s73 = sphi 0, %s73
      %s75 = sphi 0, %s73
      %s76 = sphi 0, %s75
      %s90 = sphi 0, %s76
      %s94 = sphi 0, %s94
      %s96 = sphi 0, %s94
      %s97 = sphi 0, %s96
      %s111 = sphi 0, %s97
      %s115 = sphi 0, %s115
      %s117 = sphi 0, %s115
      %s118 = sphi 0, %s117
      %s132 = sphi 0, %s118
      %s138 = sphi 0, %s140
      %s141 = sphi 0, %s138
      %s142 = sphi 0, %s141
      %s158 = sphi 0, %s142
    $region4: #{tpu_custom_call.1} parent=1 // loop_header_branch
      %21 = sbr.rel (%p19) target = $region8
    $region5: #{tpu_custom_call.1} parent=1 // loop_body
      %s23 = ssub.s32 %s18, 1
      %s24 = ssub.s32 %s18, 2
      %s25 = sadd.s32 %s18, 1
      %s26 = ssub.s32 %s18, %s25
      %p27 = scmp.eq.s32.totalorder %s26, 0
      %s29 = sadd.s32 %s28, 1
      %s30 = scalar_select %p27, %s28, %s29
      %p33 = pneg %p27
      %p34 = scmp.eq.s32.totalorder %s18, 1
      %p35 = por %p33, %p34
      %p36 = scmp.ne.s32.totalorder %s28, %s31
      %p37 = scmp.eq.s32.totalorder %s18, 0
      %p38 = por %p36, %p37
      %p39 = scmp.ne.s32.totalorder %s28, %s31
      %p40 = scmp.eq.s32.totalorder %s23, 1
      %p41 = por %p39, %p40
      %p42 = scmp.ne.s32.totalorder %s31, %s32
      %p43 = scmp.eq.s32.totalorder %s23, 0
      %p44 = por %p42, %p43
      %p45 = scmp.ne.s32.totalorder %s31, %s32
      %p46 = scmp.eq.s32.totalorder %s24, 1
      %p47 = por %p45, %p46
      %p49 = scmp.ne.s32.totalorder %s32, %s48
      %p50 = scmp.eq.s32.totalorder %s24, 0
      %p51 = por %p49, %p50
      %s53 = sadd.s32 %s52, 1
      %p56 = scmp.eq.s32.totalorder %s18, 1
      %p57 = scmp.ne.s32.totalorder %s52, %s54
      %p58 = scmp.eq.s32.totalorder %s18, 0
      %p59 = por %p57, %p58
      %p60 = scmp.ne.s32.totalorder %s52, %s54
      %p61 = scmp.eq.s32.totalorder %s23, 1
      %p62 = por %p60, %p61
      %p63 = scmp.ne.s32.totalorder %s54, %s55
      %p64 = scmp.eq.s32.totalorder %s23, 0
      %p65 = por %p63, %p64
      %p66 = scmp.ne.s32.totalorder %s54, %s55
      %p67 = scmp.eq.s32.totalorder %s24, 1
      %p68 = por %p66, %p67
      %p70 = scmp.ne.s32.totalorder %s55, %s69
      %p71 = scmp.eq.s32.totalorder %s24, 0
      %p72 = por %p70, %p71
      %s74 = sadd.s32 %s73, 1
      %p77 = scmp.eq.s32.totalorder %s18, 1
      %p78 = scmp.ne.s32.totalorder %s73, %s75
      %p79 = scmp.eq.s32.totalorder %s18, 0
      %p80 = por %p78, %p79
      %p81 = scmp.ne.s32.totalorder %s73, %s75
      %p82 = scmp.eq.s32.totalorder %s23, 1
      %p83 = por %p81, %p82
      %p84 = scmp.ne.s32.totalorder %s75, %s76
      %p85 = scmp.eq.s32.totalorder %s23, 0
      %p86 = por %p84, %p85
      %p87 = scmp.ne.s32.totalorder %s75, %s76
      %p88 = scmp.eq.s32.totalorder %s24, 1
      %p89 = por %p87, %p88
      %p91 = scmp.ne.s32.totalorder %s76, %s90
      %p92 = scmp.eq.s32.totalorder %s24, 0
      %p93 = por %p91, %p92
      %s95 = sadd.s32 %s94, 1
      %p98 = scmp.eq.s32.totalorder %s18, 1
      %p99 = scmp.ne.s32.totalorder %s94, %s96
      %p100 = scmp.eq.s32.totalorder %s18, 0
      %p101 = por %p99, %p100
      %p102 = scmp.ne.s32.totalorder %s94, %s96
      %p103 = scmp.eq.s32.totalorder %s23, 1
      %p104 = por %p102, %p103
      %p105 = scmp.ne.s32.totalorder %s96, %s97
      %p106 = scmp.eq.s32.totalorder %s23, 0
      %p107 = por %p105, %p106
      %p108 = scmp.ne.s32.totalorder %s96, %s97
      %p109 = scmp.eq.s32.totalorder %s24, 1
      %p110 = por %p108, %p109
      %p112 = scmp.ne.s32.totalorder %s97, %s111
      %p113 = scmp.eq.s32.totalorder %s24, 0
      %p114 = por %p112, %p113
      %s116 = sadd.s32 %s115, 1
      %p119 = scmp.eq.s32.totalorder %s18, 1
      %p120 = scmp.ne.s32.totalorder %s115, %s117
      %p121 = scmp.eq.s32.totalorder %s18, 0
      %p122 = por %p120, %p121
      %p123 = scmp.ne.s32.totalorder %s115, %s117
      %p124 = scmp.eq.s32.totalorder %s23, 1
      %p125 = por %p123, %p124
      %p126 = scmp.ne.s32.totalorder %s117, %s118
      %p127 = scmp.eq.s32.totalorder %s23, 0
      %p128 = por %p126, %p127
      %p129 = scmp.ne.s32.totalorder %s117, %s118
      %p130 = scmp.eq.s32.totalorder %s24, 1
      %p131 = por %p129, %p130
      %p133 = scmp.ne.s32.totalorder %s118, %s132
      %p134 = scmp.eq.s32.totalorder %s24, 0
      %p135 = por %p133, %p134
      %s136 = ssub.s32 %s18, %s25
      %p137 = scmp.eq.s32.totalorder %s136, 0
      %s139 = sadd.s32 %s138, 1
      %s140 = scalar_select %p137, %s138, %s139
      %p143 = pneg %p137
      %p144 = scmp.eq.s32.totalorder %s18, 1
      %p145 = por %p143, %p144
      %p146 = scmp.ne.s32.totalorder %s138, %s141
      %p147 = scmp.eq.s32.totalorder %s18, 0
      %p148 = por %p146, %p147
      %p149 = scmp.ne.s32.totalorder %s138, %s141
      %p150 = scmp.eq.s32.totalorder %s23, 1
      %p151 = por %p149, %p150
      %p152 = scmp.ne.s32.totalorder %s141, %s142
      %p153 = scmp.eq.s32.totalorder %s23, 0
      %p154 = por %p152, %p153
      %p155 = scmp.ne.s32.totalorder %s141, %s142
      %p156 = scmp.eq.s32.totalorder %s24, 1
      %p157 = por %p155, %p156
      %p159 = scmp.ne.s32.totalorder %s142, %s158
      %p160 = scmp.eq.s32.totalorder %s24, 0
      %p161 = por %p159, %p160
      %p162 = scmp.le.s32.totalorder 1, %s18
      %p163 = scmp.lt.s32.totalorder %s18, 3
      %p164 = pnand %p162, %p163
      %p165 = pneg %p164
      // Predicated region
      $region9: #{tpu_custom_call.1} parent=5 // pred_check
        _
      $region10: #{tpu_custom_call.1} parent=5 // pred_check_branch
        %167 = sbr.rel (%p164) target = $region12
      $region11: #{tpu_custom_call.1} parent=5 // pred_region
        %s168 = ssub.s32 %s18, 1
        // Predicated region
        $region13: #{tpu_custom_call.1} parent=11 // pred_check
          %p169 = pneg %p65
        $region14: #{tpu_custom_call.1} parent=11 // pred_check_branch
          %171 = sbr.rel (%p169) target = $region16
        $region15: #{tpu_custom_call.1} parent=11 // pred_region
          %s173 = ssub.s32 512, 512
          %174 = vsyncadd [#allocation6], %s173
          %s175 = sshll.u32 [#allocation5], 4
          %s176 = int_to_ptr.vmem [resolvable:$true] %s175
          %181 = dma.hbm_to_vmem [thread:$0]  %s1, 512, %s176, [#allocation6], 128, 128, 8
        $region16: #{tpu_custom_call.1} parent=11 // pred_fallthru
          _
        // Predicated region
        $region17: #{tpu_custom_call.1} parent=11 // pred_check
          %p182 = pneg %p86
        $region18: #{tpu_custom_call.1} parent=11 // pred_check_branch
          %184 = sbr.rel (%p182) target = $region20
        $region19: #{tpu_custom_call.1} parent=11 // pred_region
          _
        $region20: #{tpu_custom_call.1} parent=11 // pred_fallthru
          _
        // Predicated region
        $region21: #{tpu_custom_call.1} parent=11 // pred_check
          %p185 = pneg %p107
        $region22: #{tpu_custom_call.1} parent=11 // pred_check_branch
          %187 = sbr.rel (%p185) target = $region24
        $region23: #{tpu_custom_call.1} parent=11 // pred_region
          %s189 = ssub.s32 1024, 1024
          %190 = vsyncadd [#allocation6], %s189
          %s191 = sshll.u32 [#allocation7], 4
          %s192 = int_to_ptr.vmem [resolvable:$true] %s191
          %197 = dma.hbm_to_vmem [thread:$0]  %s3, 1024, %s192, [#allocation6], 128, 128, 8
        $region24: #{tpu_custom_call.1} parent=11 // pred_fallthru
          _
        // Predicated region
        $region25: #{tpu_custom_call.1} parent=11 // pred_check
          %p198 = pneg %p128
        $region26: #{tpu_custom_call.1} parent=11 // pred_check_branch
          %200 = sbr.rel (%p198) target = $region28
        $region27: #{tpu_custom_call.1} parent=11 // pred_region
          _
        $region28: #{tpu_custom_call.1} parent=11 // pred_fallthru
          _
      $region12: #{tpu_custom_call.1} parent=5 // pred_fallthru
        _
      %p201 = scmp.lt.s32.totalorder %s18, 2
      // Predicated region
      $region29: #{tpu_custom_call.1} parent=5 // pred_check
        %p202 = pneg %p201
      $region30: #{tpu_custom_call.1} parent=5 // pred_check_branch
        %204 = sbr.rel (%p202) target = $region32
      $region31: #{tpu_custom_call.1} parent=5 // pred_region
        // Predicated region
        $region33: #{tpu_custom_call.1} parent=31 // pred_check
          %p205 = pneg %p38
        $region34: #{tpu_custom_call.1} parent=31 // pred_check_branch
          %207 = sbr.rel (%p205) target = $region36
        $region35: #{tpu_custom_call.1} parent=31 // pred_region
          %s208 = sand.u32 %s28, 1
          %s209 = scalar_lea.sflag [#allocation3], %s208
          %s210 = sand.u32 %s28, 1
          %s211 = smul.addr %s210, 16
          %s212 = scalar_lea.vmem [#allocation2], %s211
          %s213 = smul.u32 2, %s18
          %s215 = ssub.s32 256, 256
          %216 = vsyncadd %s209, %s215
          %s217 = smul.addr %s213, 128
          %s218 = scalar_lea.hbm %s0, %s217
          %s219 = sshll.u32 %s212, 4
          %s220 = int_to_ptr.vmem [resolvable:$true] %s219
          %225 = dma.hbm_to_vmem [thread:$0]  %s218, 256, %s220, %s209, 128, 128, 8
        $region36: #{tpu_custom_call.1} parent=31 // pred_fallthru
          _
      $region32: #{tpu_custom_call.1} parent=5 // pred_fallthru
        _
      %p226 = scmp.le.s32.totalorder 1, %s18
      %p227 = scmp.lt.s32.totalorder %s18, 3
      %p228 = pnand %p226, %p227
      %p229 = pneg %p228
      // Predicated region
      $region37: #{tpu_custom_call.1} parent=5 // pred_check
        _
      $region38: #{tpu_custom_call.1} parent=5 // pred_check_branch
        %231 = sbr.rel (%p228) target = $region40
      $region39: #{tpu_custom_call.1} parent=5 // pred_region
        %s232 = ssub.s32 %s18, 1
        %s233 = sand.u32 %s31, 1
        %s234 = scalar_lea.sflag [#allocation3], %s233
        %s235 = sand.u32 %s31, 1
        %s236 = smul.addr %s235, 16
        %s237 = scalar_lea.vmem [#allocation2], %s236
        // Predicated region
        $region41: #{tpu_custom_call.1} parent=39 // pred_check
          %p238 = pneg %p44
        $region42: #{tpu_custom_call.1} parent=39 // pred_check_branch
          %240 = sbr.rel (%p238) target = $region44
        $region43: #{tpu_custom_call.1} parent=39 // pred_region
          %241 = dma.done %s234, 256
        $region44: #{tpu_custom_call.1} parent=39 // pred_fallthru
          _
        // Predicated region
        $region45: #{tpu_custom_call.1} parent=39 // pred_check
          %p242 = pneg %p65
        $region46: #{tpu_custom_call.1} parent=39 // pred_check_branch
          %244 = sbr.rel (%p242) target = $region48
        $region47: #{tpu_custom_call.1} parent=39 // pred_region
          %245 = dma.done [#allocation6], 512
        $region48: #{tpu_custom_call.1} parent=39 // pred_fallthru
          _
        // Predicated region
        $region49: #{tpu_custom_call.1} parent=39 // pred_check
          %p246 = pneg %p107
        $region50: #{tpu_custom_call.1} parent=39 // pred_check_branch
          %248 = sbr.rel (%p246) target = $region52
        $region51: #{tpu_custom_call.1} parent=39 // pred_region
          %249 = dma.done [#allocation6], 1024
        $region52: #{tpu_custom_call.1} parent=39 // pred_fallthru
          _
        %s250 = sand.u32 %s31, 1
        %s251 = scalar_lea.sflag [#allocation3], %s250
        %s252 = sand.u32 %s31, 1
        %s253 = smul.addr %s252, 16
        %s254 = scalar_lea.vmem [#allocation2], %s253
        %p255 = pneg %p44
        %p256 = pneg %p41
        %p257 = pneg %p65
        %p258 = pneg %p62
        %p259 = pneg %p86
        %p260 = pneg %p83
        %p261 = pneg %p107
        %p262 = pneg %p104
        %p263 = pneg %p128
        %p264 = pneg %p125
        %p265 = pneg %p154
        %p266 = pneg %p151
        %s267 = sand.u32 %s141, 1
        %s268 = scalar_lea.sflag [#allocation4], %s267
        %s269 = sand.u32 %s141, 1
        %s270 = smul.addr %s269, 16
        %s271 = scalar_lea.vmem [#allocation8], %s270
        %s272 = smul.u32 2, %s23
        %s273 = smul.u32 2, %s23
        %v274 = vld [vmem:[%s237] sm:$0xff]
        %v275 = vld [vmem:[%s237 + $0x8] sm:$0xff]
        %v276 = vld [vmem:[#allocation5] sm:$0xff]
        %v277 = vld [vmem:[#allocation5 + $0x8] sm:$0xff]
        %v278 = vld [vmem:[#allocation5 + $0x10] sm:$0xff]
        %v279 = vld [vmem:[#allocation5 + $0x18] sm:$0xff]
        %v280 = vld [vmem:[%s2] sm:$0x1]
        %v282 = vlaneseq
        %v283 = vshrl.u32 %v282, 7
        %v284 = vsub.s32 0, %v283
        %v285 = vrot.slane %v280, %v284
        %vm287 = vcmask 261120
        %v289 = vsel %vm287, %v274, 0
        %v292 = vsel %vm287, %v275, 0
        %294 = vmatprep.subr.mxu0 0.0
        %295 = vmatpush1.msra.mxu0 %v276
        %296 = vmatprep.subr.mxu0 0.0
        %297 = vmatpush1.msra.mxu0 %v277
        %298 = vmatprep.subr.mxu0 0.0
        %299 = vmatpush1.msra.mxu0 %v278
        %300 = vmatprep.subr.mxu0 0.0
        %301 = vmatpush1.msra.mxu0 %v279
        %302 = vmatprep.subr.mxu0 0.0
        %303 = vmatpush1.msra.mxu0 0.0
        %304 = vmatprep.subr.mxu0 0.0
        %305 = vmatpush1.msra.mxu0 0.0
        %306 = vmatprep.subr.mxu0 0.0
        %307 = vmatpush1.msra.mxu0 0.0
        %308 = vmatprep.subr.mxu0 0.0
        %309 = vmatpush1.msra.mxu0 0.0
        %310 = vmatprep.subr.mxu0 0.0
        %311 = vmatpush1.msra.mxu0 0.0
        %312 = vmatprep.subr.mxu0 0.0
        %313 = vmatpush1.msra.mxu0 0.0
        %314 = vmatprep.subr.mxu0 0.0
        %315 = vmatpush1.msra.mxu0 0.0
        %316 = vmatprep.subr.mxu0 0.0
        %317 = vmatpush1.msra.mxu0 0.0
        %318 = vmatprep.subr.mxu0 0.0
        %319 = vmatpush1.msra.mxu0 0.0
        %320 = vmatprep.subr.mxu0 0.0
        %321 = vmatpush1.msra.mxu0 0.0
        %322 = vmatprep.subr.mxu0 0.0
        %323 = vmatpush1.msra.mxu0 0.0
        %324 = vmatprep.subr.mxu0 0.0
        %325 = vmatpush1.msra.mxu0 0.0
        %326 = vmatprep.subr.mxu0 0.0
        %327 = vmatpush1.msra.mxu0 0.0
        %328 = vmatprep.subr.mxu0 0.0
        %329 = vmatpush1.msra.mxu0 0.0
        %330 = vmatprep.subr.mxu0 0.0
        %331 = vmatpush1.msra.mxu0 0.0
        %332 = vmatprep.subr.mxu0 0.0
        %333 = vmatpush1.msra.mxu0 0.0
        %334 = vmatprep.subr.mxu0 0.0
        %335 = vmatpush1.msra.mxu0 0.0
        %336 = vmatprep.subr.mxu0 0.0
        %337 = vmatpush1.msra.mxu0 0.0
        %338 = vmatprep.subr.mxu0 0.0
        %339 = vmatpush1.msra.mxu0 0.0
        %340 = vmatprep.subr.mxu0 0.0
        %341 = vmatpush1.msra.mxu0 0.0
        %342 = vmatprep.subr.mxu0 0.0
        %343 = vmatpush1.msra.mxu0 0.0
        %344 = vmatprep.subr.mxu0 0.0
        %345 = vmatpush1.msra.mxu0 0.0
        %346 = vmatprep.subr.mxu0 0.0
        %347 = vmatpush1.msra.mxu0 0.0
        %348 = vmatprep.subr.mxu0 0.0
        %349 = vmatpush1.msra.mxu0 0.0
        %350 = vmatprep.subr.mxu0 0.0
        %351 = vmatpush1.msra.mxu0 0.0
        %352 = vmatprep.subr.mxu0 0.0
        %353 = vmatpush1.msra.mxu0 0.0
        %354 = vmatprep.subr.mxu0 0.0
        %355 = vmatpush1.msra.mxu0 0.0
        %356 = vmatprep.subr.mxu0 0.0
        %357 = vmatpush1.msra.mxu0 0.0
        %358 = vmatprep.mubr.f32.mxu0 0.0
        %359 = vmatmul.mubr.f32.gmra.mrb[0].mxu0 %v289
        %v360 = vpop.f32.mrb[0].mxu0
        %v361 = vadd.f32 %v285, %v360
        %v362 = vpop.f32.mrb[0].mxu0
        %363 = vmatprep.mubr.f32.mxu0 0.0
        %364 = vmatmul.mubr.f32.gmra.mrb[0].mxu0 %v292
        %v365 = vpop.f32.mrb[0].mxu0
        %v366 = vadd.f32 %v285, %v365
        %v367 = vpop.f32.mrb[0].mxu0
        %368 = vdwg.mxu0
        %v369 = vmax.f32 %v361, 0.0
        %v370 = vmax.f32 %v366, 0.0
        %v371 = vld [vmem:[#allocation7] sm:$0xff]
        %v372 = vld [vmem:[#allocation7 + $0x8] sm:$0xff]
        %v373 = vld [vmem:[#allocation7 + $0x10] sm:$0xff]
        %v374 = vld [vmem:[#allocation7 + $0x18] sm:$0xff]
        %v375 = vld [vmem:[#allocation7 + $0x20] sm:$0xff]
        %v376 = vld [vmem:[#allocation7 + $0x28] sm:$0xff]
        %v377 = vld [vmem:[#allocation7 + $0x30] sm:$0xff]
        %v378 = vld [vmem:[#allocation7 + $0x38] sm:$0xff]
        %v379 = vld [vmem:[%s4] sm:$0x1]
        %v381 = vlaneseq
        %v382 = vshrl.u32 %v381, 7
        %v383 = vsub.s32 0, %v382
        %v384 = vrot.slane %v379, %v383
        %vm386 = vcmask 523264
        %v388 = vsel %vm386, %v369, 0
        %v391 = vsel %vm386, %v370, 0
        %393 = vmatprep.subr.mxu0 0.0
        %394 = vmatpush1.msra.mxu0 %v371
        %395 = vmatprep.subr.mxu0 0.0
        %396 = vmatpush1.msra.mxu0 %v372
        %397 = vmatprep.subr.mxu0 0.0
        %398 = vmatpush1.msra.mxu0 %v373
        %399 = vmatprep.subr.mxu0 0.0
        %400 = vmatpush1.msra.mxu0 %v374
        %401 = vmatprep.subr.mxu0 0.0
        %402 = vmatpush1.msra.mxu0 %v375
        %403 = vmatprep.subr.mxu0 0.0
        %404 = vmatpush1.msra.mxu0 %v376
        %405 = vmatprep.subr.mxu0 0.0
        %406 = vmatpush1.msra.mxu0 %v377
        %407 = vmatprep.subr.mxu0 0.0
        %408 = vmatpush1.msra.mxu0 %v378
        %409 = vmatprep.subr.mxu0 0.0
        %410 = vmatpush1.msra.mxu0 0.0
        %411 = vmatprep.subr.mxu0 0.0
        %412 = vmatpush1.msra.mxu0 0.0
        %413 = vmatprep.subr.mxu0 0.0
        %414 = vmatpush1.msra.mxu0 0.0
        %415 = vmatprep.subr.mxu0 0.0
        %416 = vmatpush1.msra.mxu0 0.0
        %417 = vmatprep.subr.mxu0 0.0
        %418 = vmatpush1.msra.mxu0 0.0
        %419 = vmatprep.subr.mxu0 0.0
        %420 = vmatpush1.msra.mxu0 0.0
        %421 = vmatprep.subr.mxu0 0.0
        %422 = vmatpush1.msra.mxu0 0.0
        %423 = vmatprep.subr.mxu0 0.0
        %424 = vmatpush1.msra.mxu0 0.0
        %425 = vmatprep.subr.mxu0 0.0
        %426 = vmatpush1.msra.mxu0 0.0
        %427 = vmatprep.subr.mxu0 0.0
        %428 = vmatpush1.msra.mxu0 0.0
        %429 = vmatprep.subr.mxu0 0.0
        %430 = vmatpush1.msra.mxu0 0.0
        %431 = vmatprep.subr.mxu0 0.0
        %432 = vmatpush1.msra.mxu0 0.0
        %433 = vmatprep.subr.mxu0 0.0
        %434 = vmatpush1.msra.mxu0 0.0
        %435 = vmatprep.subr.mxu0 0.0
        %436 = vmatpush1.msra.mxu0 0.0
        %437 = vmatprep.subr.mxu0 0.0
        %438 = vmatpush1.msra.mxu0 0.0
        %439 = vmatprep.subr.mxu0 0.0
        %440 = vmatpush1.msra.mxu0 0.0
        %441 = vmatprep.subr.mxu0 0.0
        %442 = vmatpush1.msra.mxu0 0.0
        %443 = vmatprep.subr.mxu0 0.0
        %444 = vmatpush1.msra.mxu0 0.0
        %445 = vmatprep.subr.mxu0 0.0
        %446 = vmatpush1.msra.mxu0 0.0
        %447 = vmatprep.subr.mxu0 0.0
        %448 = vmatpush1.msra.mxu0 0.0
        %449 = vmatprep.subr.mxu0 0.0
        %450 = vmatpush1.msra.mxu0 0.0
        %451 = vmatprep.subr.mxu0 0.0
        %452 = vmatpush1.msra.mxu0 0.0
        %453 = vmatprep.subr.mxu0 0.0
        %454 = vmatpush1.msra.mxu0 0.0
        %455 = vmatprep.subr.mxu0 0.0
        %456 = vmatpush1.msra.mxu0 0.0
        %457 = vmatprep.mubr.f32.mxu0 0.0
        %458 = vmatmul.mubr.f32.gmra.mrb[0].mxu0 %v388
        %v459 = vpop.f32.mrb[0].mxu0
        %v460 = vadd.f32 %v384, %v459
        %v461 = vpop.f32.mrb[0].mxu0
        %462 = vmatprep.mubr.f32.mxu0 0.0
        %463 = vmatmul.mubr.f32.gmra.mrb[0].mxu0 %v391
        %v464 = vpop.f32.mrb[0].mxu0
        %v465 = vadd.f32 %v384, %v464
        %v466 = vpop.f32.mrb[0].mxu0
        %467 = vdwg.mxu0
        %468 = vst [vmem:[%s271] sm:$0xff] %v460
        %469 = vst [vmem:[%s271 + $0x8] sm:$0xff] %v465
        %s470 = sand.u32 %s141, 1
        %s471 = scalar_lea.sflag [#allocation4], %s470
        %s472 = sand.u32 %s141, 1
        %s473 = smul.addr %s472, 16
        %s474 = scalar_lea.vmem [#allocation8], %s473
        // Predicated region
        $region53: #{tpu_custom_call.1} parent=39 // pred_check
          %p475 = pneg %p151
        $region54: #{tpu_custom_call.1} parent=39 // pred_check_branch
          %477 = sbr.rel (%p475) target = $region56
        $region55: #{tpu_custom_call.1} parent=39 // pred_region
          %s478 = smul.u32 2, %s23
          %s480 = ssub.s32 256, 256
          %481 = vsyncadd %s471, %s480
          %s482 = smul.addr %s478, 128
          %s483 = scalar_lea.hbm %s5, %s482
          %s484 = sshll.u32 %s474, 4
          %s485 = int_to_ptr.vmem [resolvable:$true] %s484
          %490 = dma.vmem_to_hbm [thread:$0]  %s485, 256, %s483, %s471, 128, 128, 8
        $region56: #{tpu_custom_call.1} parent=39 // pred_fallthru
          _
      $region40: #{tpu_custom_call.1} parent=5 // pred_fallthru
        _
      %p491 = scmp.le.s32.totalorder 2, %s18
      // Predicated region
      $region57: #{tpu_custom_call.1} parent=5 // pred_check
        %p492 = pneg %p491
      $region58: #{tpu_custom_call.1} parent=5 // pred_check_branch
        %494 = sbr.rel (%p492) target = $region60
      $region59: #{tpu_custom_call.1} parent=5 // pred_region
        %s495 = ssub.s32 %s18, 2
        // Predicated region
        $region61: #{tpu_custom_call.1} parent=59 // pred_check
          %p496 = pneg %p157
        $region62: #{tpu_custom_call.1} parent=59 // pred_check_branch
          %498 = sbr.rel (%p496) target = $region64
        $region63: #{tpu_custom_call.1} parent=59 // pred_region
          %s499 = sand.u32 %s142, 1
          %s500 = scalar_lea.sflag [#allocation4], %s499
          %s501 = sand.u32 %s142, 1
          %s502 = smul.addr %s501, 16
          %s503 = scalar_lea.vmem [#allocation8], %s502
          %504 = dma.done %s500, 256
        $region64: #{tpu_custom_call.1} parent=59 // pred_fallthru
          _
      $region60: #{tpu_custom_call.1} parent=5 // pred_fallthru
        _
    $region6: #{tpu_custom_call.1} parent=1 // loop_footer
      %s22 = sadd.s32 1, %s18
    $region7: #{tpu_custom_call.1} parent=1 // loop_footer_branch
      %17 = sbr.rel target = $region3
    $region8: #{tpu_custom_call.1} parent=1 // loop_exit
      _
    %505 = vsyncpa [#allocation3], 1
    %s506 = scalar_lea.sflag [#allocation3], 1
    %507 = vsyncpa %s506, 1
    %508 = vsyncpa [#allocation6], 1
    %509 = vsyncpa [#allocation4], 1
    %s510 = scalar_lea.sflag [#allocation4], 1
    %511 = vsyncpa %s510, 1

</llo_original>
